<compile_context>
chip_gen: v7x
topology: tpu7x:2x2x1
jax: 0.10.0
libtpu: 0.0.40
codegen_flags: <defaults>
</compile_context>

<pallas_src>
import functools

import jax
import jax.numpy as jnp
from jax.experimental import pallas as pl
from jax.experimental.pallas import tpu as pltpu


# ---------------------------------------------------------------------------
# VMEM sizing helpers (generation-aware, with safe fallbacks off-TPU).
# ---------------------------------------------------------------------------
_DEFAULT_VMEM_CAP = 128 * 1024 * 1024  # v5e / v6e physical VMEM


def _vmem_capacity_bytes():
    cap = _DEFAULT_VMEM_CAP
    try:
        info = pltpu.get_tpu_info()
        cap = int(getattr(info, "vmem_capacity_bytes", cap))
    except Exception:
        pass
    return cap


def _vmem_block_budget_bytes():
    # Budget for *all* double-buffered streamed blocks of one kernel.
    # ~1/3 of physical VMEM, capped at 40 MiB (v7x: 64 MiB phys -> ~21 MiB).
    return min(_vmem_capacity_bytes() // 3, 40 * 1024 * 1024)


def _vmem_limit_bytes():
    # Explicit scoped-VMEM limit so the compiler accepts large blocks
    # (default scoped limit is only 16 MiB on v5e / 32 MiB on v6e & v7x).
    return int(min(_vmem_capacity_bytes() * 3 // 4, 100 * 1024 * 1024))


def _round_up(x, m):
    return ((x + m - 1) // m) * m


def _pick_tm(rows, row_bytes, n_streams, budget_bytes, cap=1024):
    """Largest row tile (multiple of 8, <= cap) fitting the VMEM byte budget.

    n_streams = number of (tm, width) arrays the kernel streams; each is
    double-buffered by the BlockSpec pipeline.
    """
    tm = budget_bytes // max(1, 2 * n_streams * row_bytes)
    tm = max(8, min(cap, (tm // 8) * 8))
    tm = min(tm, _round_up(rows, 8))
    return int(tm)


def _pad_rows(arr, rows_padded):
    pad = rows_padded - arr.shape[0]
    if pad == 0:
        return arr
    return jnp.pad(arr, ((0, pad), (0, 0)))


# ---------------------------------------------------------------------------
# Kernel 1: LayerNorm over the last (feature / lane) axis, PyTorch semantics.
# ---------------------------------------------------------------------------
def _layernorm_kernel(x_ref, a_ref, b_ref, o_ref, *, eps, d_model):
    x = x_ref[...].astype(jnp.float32)                        # (tm, D)
    mean = jnp.mean(x, axis=-1, keepdims=True)                # (tm, 1)
    xc = x - mean
    # torch .std() default is the unbiased estimator (divide by D - 1)
    var_unbiased = jnp.sum(xc * xc, axis=-1, keepdims=True) * (1.0 / (d_model - 1))
    std = jnp.sqrt(var_unbiased)
    inv = 1.0 / (std + eps)                                   # cheap (tm, 1) recip
    y = a_ref[...] * (xc * inv) + b_ref[...]                  # broadcast multiply
    o_ref[...] = y.astype(o_ref.dtype)


def _layernorm_forward(x2, a2, b2, *, eps, out_dtype=None):
    n, d = x2.shape
    out_dtype = x2.dtype if out_dtype is None else out_dtype

    tm = _pick_tm(n, d * 4, n_streams=2, budget_bytes=_vmem_block_budget_bytes())
    n_pad = _round_up(n, tm)
    xp = _pad_rows(x2, n_pad)

    kernel = functools.partial(_layernorm_kernel, eps=eps, d_model=d)
    out = pl.pallas_call(
        kernel,
        out_shape=jax.ShapeDtypeStruct((n_pad, d), out_dtype),
        grid_spec=pltpu.PrefetchScalarGridSpec(
            num_scalar_prefetch=0,
            grid=(n_pad // tm,),
            in_specs=[
                pl.BlockSpec((tm, d), lambda i: (i, 0)),
                pl.BlockSpec((1, d), lambda i: (0, 0)),
                pl.BlockSpec((1, d), lambda i: (0, 0)),
            ],
            out_specs=pl.BlockSpec((tm, d), lambda i: (i, 0)),
        ),
        compiler_params=pltpu.CompilerParams(
            dimension_semantics=("parallel",),
            vmem_limit_bytes=_vmem_limit_bytes(),
        ),
    )(xp, a2.reshape(1, d), b2.reshape(1, d))
    return out[:n] if n_pad != n else out


# ---------------------------------------------------------------------------
# Kernel 2 (train path): fused dropout + residual add
#   out = x + where(u < keep_prob, y / keep_prob, 0)
# Uniforms `u` are precomputed with jax.random and streamed in.
# ---------------------------------------------------------------------------
def _dropout_residual_kernel(x_ref, y_ref, u_ref, o_ref, *, keep_prob):
    y = y_ref[...]
    keep = u_ref[...] < keep_prob                             # direct f32 compare
    dropped = jnp.where(keep, y * (1.0 / keep_prob), jnp.zeros_like(y))
    o_ref[...] = x_ref[...] + dropped.astype(o_ref.dtype)


def _lane_dense_view(total, n, d):
    """Pick a lane-dense (rows, width) reshape for purely elementwise work."""
    for w in (2048, 1024, 512, 256, 128):
        if total % w == 0:
            return total // w, w
    return n, d  # fallback: keep (n, D)


def _dropout_residual(x2, y2, u2, keep_prob):
    n, d = x2.shape
    rows, width = _lane_dense_view(n * d, n, d)
    xs = x2.reshape(rows, width)
    ys = y2.reshape(rows, width)
    us = u2.reshape(rows, width)

    # 4 streamed arrays: x, y, u, out (each double-buffered by the pipeline).
    tm = _pick_tm(rows, width * 4, n_streams=4,
                  budget_bytes=_vmem_block_budget_bytes())
    rows_pad = _round_up(rows, tm)
    xs = _pad_rows(xs, rows_pad)
    ys = _pad_rows(ys, rows_pad)
    us = _pad_rows(us, rows_pad)

    kernel = functools.partial(_dropout_residual_kernel, keep_prob=keep_prob)
    out = pl.pallas_call(
        kernel,
        out_shape=jax.ShapeDtypeStruct((rows_pad, width), x2.dtype),
        grid_spec=pltpu.PrefetchScalarGridSpec(
            num_scalar_prefetch=0,
            grid=(rows_pad // tm,),
            in_specs=[
                pl.BlockSpec((tm, width), lambda i: (i, 0)),
                pl.BlockSpec((tm, width), lambda i: (i, 0)),
                pl.BlockSpec((tm, width), lambda i: (i, 0)),
            ],
            out_specs=pl.BlockSpec((tm, width), lambda i: (i, 0)),
        ),
        compiler_params=pltpu.CompilerParams(
            dimension_semantics=("parallel",),
            vmem_limit_bytes=_vmem_limit_bytes(),
        ),
    )(xs, ys, us)
    out = out[:rows] if rows_pad != rows else out
    return out.reshape(n, d)


# ---------------------------------------------------------------------------
# SublayerConnection forward.
# ---------------------------------------------------------------------------
def sublayer_connection_forward(
    x, a2, b2, sublayer, *, dropout_p=0.1, training=False, rng_key=None,
    eps=1e-6, ln_out_dtype=None,
):
    """SublayerConnection: x + dropout(sublayer(LayerNorm(x))).

    x: (..., d_model) f32;  a2, b2: (d_model,) LayerNorm scale/shift;
    sublayer: arbitrary JAX callable mapping (..., d_model) -> (..., d_model).
    Set ln_out_dtype=jnp.bfloat16 if the sublayer starts with a bf16 matmul
    (halves the HBM traffic of the normalized intermediate).
    """
    d = x.shape[-1]
    lead = x.shape[:-1]
    x2 = x.reshape(-1, d)

    normed = _layernorm_forward(x2, a2, b2, eps=eps, out_dtype=ln_out_dtype)
    # The sublayer is an arbitrary external callable; apply it as plain JAX.
    y2 = sublayer(normed.reshape(*lead, d)).reshape(-1, d).astype(x2.dtype)

    if training and dropout_p > 0.0:
        if rng_key is None:
            rng_key = jax.random.PRNGKey(0)
        keep_prob = 1.0 - float(dropout_p)
        u2 = jax.random.uniform(rng_key, x2.shape, dtype=jnp.float32)
        out2 = _dropout_residual(x2, y2, u2, keep_prob)
    else:
        # Eval: plain add so XLA fuses the residual into the sublayer's
        # epilogue instead of forcing an extra HBM round-trip.
        out2 = x2 + y2
    return out2.reshape(*lead, d)


if __name__ == "__main__":
    # Small shapes consistent with the module: batch=2, seq=8, d_model=32
    batch, seq, d_model = 2, 8, 32
    dropout_p = 0.1
    eps = 1e-6

    key = jax.random.PRNGKey(0)
    kx, ka, kb, kw, kbs, kdrop = jax.random.split(key, 6)

    x = jax.random.normal(kx, (batch, seq, d_model), dtype=jnp.float32)
    # LayerNorm params (module inits ones/zeros; perturb to exercise scale/shift)
    a2 = 1.0 + 0.1 * jax.random.normal(ka, (d_model,), dtype=jnp.float32)
    b2 = 0.1 * jax.random.normal(kb, (d_model,), dtype=jnp.float32)

    # A concrete "sublayer" for the demo: Linear(d_model, d_model) + tanh.
    w_s = jax.random.normal(kw, (d_model, d_model), dtype=jnp.float32) / (d_model ** 0.5)
    b_s = 0.01 * jax.random.normal(kbs, (d_model,), dtype=jnp.float32)
    sublayer = lambda y: jnp.tanh(y @ w_s + b_s)

    # Plain-JAX reference for LayerNorm (torch semantics: unbiased std, eps on std).
    mean = jnp.mean(x, axis=-1, keepdims=True)
    std = jnp.std(x, axis=-1, keepdims=True, ddof=1)
    normed_ref = a2 * (x - mean) / (std + eps) + b2

    # --- Eval mode (dropout inactive): must match the reference exactly -------
    out = sublayer_connection_forward(
        x, a2, b2, sublayer, dropout_p=dropout_p, training=False, eps=eps
    )
    out = jax.block_until_ready(out)
    ref = x + sublayer(normed_ref)
    assert out.shape == (batch, seq, d_model)
    assert jnp.allclose(out, ref, atol=1e-5, rtol=1e-5), float(
        jnp.max(jnp.abs(out - ref))
    )

    # --- Training mode: fused dropout + residual-add kernel -------------------
    out_tr = sublayer_connection_forward(
        x, a2, b2, sublayer, dropout_p=dropout_p, training=True,
        rng_key=kdrop, eps=eps,
    )
    out_tr = jax.block_until_ready(out_tr)
    assert out_tr.shape == (batch, seq, d_model)

    # Exact reference using the same uniforms the forward pass draws.
    keep_prob = 1.0 - dropout_p
    u_ref = jax.random.uniform(
        kdrop, (batch * seq, d_model), dtype=jnp.float32
    ).reshape(batch, seq, d_model)
    y_ref = sublayer(normed_ref)
    ref_tr = x + jnp.where(u_ref < keep_prob, y_ref / keep_prob, 0.0)
    assert jnp.allclose(out_tr, ref_tr, atol=1e-5, rtol=1e-5), float(
        jnp.max(jnp.abs(out_tr - ref_tr))
    )
    assert bool(jnp.all(jnp.isfinite(out_tr)))

    print("KERNEL_OK")
</pallas_src>

<mosaic_0001>
module attributes {stable_mosaic.version = 11 : i64} {
  func.func @_layernorm_kernel(%arg0: i32, %arg1: memref<16x32xf32, #tpu.memory_space<vmem>>, %arg2: memref<1x32xf32, #tpu.memory_space<vmem>>, %arg3: memref<1x32xf32, #tpu.memory_space<vmem>>, %arg4: memref<16x32xf32, #tpu.memory_space<vmem>>) attributes {dimension_semantics = [#tpu.dimension_semantics<parallel>], iteration_bounds = array<i64: 1>, scalar_prefetch = 0 : i64, scratch_operands = 0 : i64, tpu.core_type = #tpu.core_type<tc>, window_params = [{transform_indices = @transform_0, window_bounds = array<i64: 16, 32>}, {pipeline_mode = #tpu.pipeline_mode<synchronous>, transform_indices = @transform_1, window_bounds = array<i64: 1, 32>}, {pipeline_mode = #tpu.pipeline_mode<synchronous>, transform_indices = @transform_2, window_bounds = array<i64: 1, 32>}, {transform_indices = @transform_3, window_bounds = array<i64: 16, 32>}]} {
    %c0 = arith.constant 0 : index
    %c0_0 = arith.constant 0 : index
    %0 = vector.load %arg1[%c0, %c0_0] : memref<16x32xf32, #tpu.memory_space<vmem>>, vector<16x32xf32>
    %cst = arith.constant dense<0.000000e+00> : vector<16xf32>
    %1 = vector.multi_reduction <add>, %0, %cst [1] : vector<16x32xf32> to vector<16xf32>
    %2 = vector.shape_cast %1 : vector<16xf32> to vector<16x1xf32>
    %cst_1 = arith.constant 3.200000e+01 : f32
    %3 = vector.broadcast %cst_1 : f32 to vector<16x1xf32>
    %4 = arith.divf %2, %3 : vector<16x1xf32>
    %5 = vector.broadcast %4 : vector<16x1xf32> to vector<16x32xf32>
    %6 = arith.subf %0, %5 : vector<16x32xf32>
    %7 = arith.mulf %6, %6 : vector<16x32xf32>
    %cst_2 = arith.constant dense<0.000000e+00> : vector<16xf32>
    %8 = vector.multi_reduction <add>, %7, %cst_2 [1] : vector<16x32xf32> to vector<16xf32>
    %9 = vector.shape_cast %8 : vector<16xf32> to vector<16x1xf32>
    %cst_3 = arith.constant 0.0322580636 : f32
    %10 = vector.broadcast %cst_3 : f32 to vector<16x1xf32>
    %11 = arith.mulf %9, %10 : vector<16x1xf32>
    %12 = math.sqrt %11 : vector<16x1xf32>
    %cst_4 = arith.constant 9.99999997E-7 : f32
    %13 = vector.broadcast %cst_4 : f32 to vector<16x1xf32>
    %14 = arith.addf %12, %13 : vector<16x1xf32>
    %cst_5 = arith.constant 1.000000e+00 : f32
    %15 = vector.broadcast %cst_5 : f32 to vector<16x1xf32>
    %16 = arith.divf %15, %14 : vector<16x1xf32>
    %c0_6 = arith.constant 0 : index
    %c0_7 = arith.constant 0 : index
    %17 = vector.load %arg2[%c0_6, %c0_7] : memref<1x32xf32, #tpu.memory_space<vmem>>, vector<1x32xf32>
    %18 = vector.broadcast %16 : vector<16x1xf32> to vector<16x32xf32>
    %19 = arith.mulf %6, %18 : vector<16x32xf32>
    %20 = vector.broadcast %17 : vector<1x32xf32> to vector<16x32xf32>
    %21 = arith.mulf %20, %19 : vector<16x32xf32>
    %c0_8 = arith.constant 0 : index
    %c0_9 = arith.constant 0 : index
    %22 = vector.load %arg3[%c0_8, %c0_9] : memref<1x32xf32, #tpu.memory_space<vmem>>, vector<1x32xf32>
    %23 = vector.broadcast %22 : vector<1x32xf32> to vector<16x32xf32>
    %24 = arith.addf %21, %23 : vector<16x32xf32>
    %c0_10 = arith.constant 0 : index
    %c0_11 = arith.constant 0 : index
    %25 = vector.load %arg4[%c0_10, %c0_11] : memref<16x32xf32, #tpu.memory_space<vmem>>, vector<16x32xf32>
    tpu.vector_store %arg4[%c0_10, %c0_11], %24 {strides = array<i32>} : memref<16x32xf32, #tpu.memory_space<vmem>>, vector<16x32xf32>,
    return
  }
  func.func @transform_0(%arg0: i32) -> (i32, i32) {
    %c0_i32 = arith.constant 0 : i32
    %c0_i32_0 = arith.constant 0 : i32
    return %arg0, %c0_i32 : i32, i32
  }
  func.func @transform_1(%arg0: i32) -> (i32, i32) {
    %c0_i32 = arith.constant 0 : i32
    %c0_i32_0 = arith.constant 0 : i32
    %c0_i32_1 = arith.constant 0 : i32
    return %c0_i32, %c0_i32_0 : i32, i32
  }
  func.func @transform_2(%arg0: i32) -> (i32, i32) {
    %c0_i32 = arith.constant 0 : i32
    %c0_i32_0 = arith.constant 0 : i32
    %c0_i32_1 = arith.constant 0 : i32
    return %c0_i32, %c0_i32_0 : i32, i32
  }
  func.func @transform_3(%arg0: i32) -> (i32, i32) {
    %c0_i32 = arith.constant 0 : i32
    %c0_i32_0 = arith.constant 0 : i32
    return %arg0, %c0_i32 : i32, i32
  }
}

</mosaic_0001>

<llo_original>
// kernel: tpu_custom_call.1
$region0: #{tpu_custom_call.1}
  #allocation0 [shape = 'u32[]', space=smem, size = 0x4, offset = 0x4, fixed_abs, tag = 'smem constant byte address 0x4 - core index']
  #allocation1 [shape = 'u32[144,128]{1,0:T(1,128)}', space=vmem, size = 0x12000, scoped, tag = 'internal scratch']
  %s0 = inlined_call_operand.hbm [shape: f32[16,32], index: 0, kind: input, shape index: {}]
  %s1 = inlined_call_operand.hbm [shape: f32[1,32], index: 1, kind: input, shape index: {}]
  %s2 = inlined_call_operand.hbm [shape: f32[1,32], index: 2, kind: input, shape index: {}]
  %s3 = inlined_call_operand.hbm [shape: f32[16,32], index: 3, kind: output, shape index: {}]
  %s4 = sld [smem:[#allocation0]]
  $region34: #{tpu_custom_call.1} parent=0
    _
  %s6 = ssub.s32 1, %s4
  %s7 = scalar_select 0, %s6, %s4
  $region1: #{tpu_custom_call.1} parent=0
    #allocation2 [shape = 'u8[8192]{0}', space=vmem, size = 0x2000, scoped, tag = 'input window, operand 0, single buffered']
    #allocation3 [shape = 's32[1]{0}', space=sflag, size = 0x4, scoped, tag = 'scoped memory for tpu_custom_call.1']
    #allocation4 [shape = 's32[1]{0}', space=sflag, size = 0x4, scoped, tag = 'scoped memory for tpu_custom_call.1']
    #allocation5 [shape = 'u8[512]{0}', space=vmem, size = 0x400, scoped, tag = 'input window, operand 1, single buffered']
    #allocation6 [shape = 's32[1]{0}', space=sflag, size = 0x4, scoped, tag = 'scoped memory for tpu_custom_call.1']
    #allocation7 [shape = 'u8[512]{0}', space=vmem, size = 0x400, scoped, tag = 'input window, operand 2, single buffered']
    #allocation8 [shape = 'u8[8192]{0}', space=vmem, size = 0x2000, scoped, tag = 'output window, operand 0, single buffered']
    %8 = vsyncpa [#allocation3], 0
    %9 = vsyncpa [#allocation6], 0
    %10 = vsyncpa [#allocation4], 0
    // Predicated region
    $region2: #{tpu_custom_call.1} parent=1 // pred_check
      _
    $region3: #{tpu_custom_call.1} parent=1 // pred_check_branch
      %12 = sbr.rel (0) target = $region5
    $region4: #{tpu_custom_call.1} parent=1 // pred_region
      %s14 = ssub.s32 256, 256
      %15 = vsyncadd [#allocation3], %s14
      %s16 = sshll.u32 [#allocation2], 4
      %s17 = int_to_ptr.vmem [resolvable:$true] %s16
      %22 = dma.hbm_to_vmem [thread:$0]  %s0, 256, %s17, [#allocation3], 128, 128, 8
    $region5: #{tpu_custom_call.1} parent=1 // pred_fallthru
      _
    // Predicated region
    $region6: #{tpu_custom_call.1} parent=1 // pred_check
      _
    $region7: #{tpu_custom_call.1} parent=1 // pred_check_branch
      %24 = sbr.rel (0) target = $region9
    $region8: #{tpu_custom_call.1} parent=1 // pred_region
      %s26 = ssub.s32 16, 16
      %27 = vsyncadd [#allocation6], %s26
      %s29 = sshll.u32 [#allocation5], 4
      %s30 = int_to_ptr.vmem [resolvable:$true] %s29
      %32 = dma.hbm_to_vmem [thread:$0]  %s1, 16, %s30, [#allocation6]
    $region9: #{tpu_custom_call.1} parent=1 // pred_fallthru
      _
    // Predicated region
    $region10: #{tpu_custom_call.1} parent=1 // pred_check
      _
    $region11: #{tpu_custom_call.1} parent=1 // pred_check_branch
      %34 = sbr.rel (0) target = $region13
    $region12: #{tpu_custom_call.1} parent=1 // pred_region
      %s36 = ssub.s32 16, 16
      %37 = vsyncadd [#allocation6], %s36
      %s39 = sshll.u32 [#allocation7], 4
      %s40 = int_to_ptr.vmem [resolvable:$true] %s39
      %42 = dma.hbm_to_vmem [thread:$0]  %s2, 16, %s40, [#allocation6]
    $region13: #{tpu_custom_call.1} parent=1 // pred_fallthru
      _
    // Predicated region
    $region14: #{tpu_custom_call.1} parent=1 // pred_check
      _
    $region15: #{tpu_custom_call.1} parent=1 // pred_check_branch
      %44 = sbr.rel (0) target = $region17
    $region16: #{tpu_custom_call.1} parent=1 // pred_region
      %45 = dma.done [#allocation3], 256
    $region17: #{tpu_custom_call.1} parent=1 // pred_fallthru
      _
    // Predicated region
    $region18: #{tpu_custom_call.1} parent=1 // pred_check
      _
    $region19: #{tpu_custom_call.1} parent=1 // pred_check_branch
      %47 = sbr.rel (0) target = $region21
    $region20: #{tpu_custom_call.1} parent=1 // pred_region
      %48 = dma.done [#allocation6], 16
    $region21: #{tpu_custom_call.1} parent=1 // pred_fallthru
      _
    // Predicated region
    $region22: #{tpu_custom_call.1} parent=1 // pred_check
      _
    $region23: #{tpu_custom_call.1} parent=1 // pred_check_branch
      %50 = sbr.rel (0) target = $region25
    $region24: #{tpu_custom_call.1} parent=1 // pred_region
      %51 = dma.done [#allocation6], 16
    $region25: #{tpu_custom_call.1} parent=1 // pred_fallthru
      _
    %v52 = vld [vmem:[#allocation2] sm:$0xff]
    %v53 = vld [vmem:[#allocation2 + $0x8] sm:$0xff]
    %vm54 = vcmask 261120
    %v55 = vsel %vm54, %v52, 0.0
    %56 = vadd.xlane.f32.xlu0 %v55
    %v57 = vpop.xlane.xlu0 %56
    %v58 = vsel %vm54, %v53, 0.0
    %59 = vadd.xlane.f32.xlu0 %v58
    %v60 = vpop.xlane.xlu0 %59
    %v61 = vrcp.pop 32.0
    %v62 = vmul.f32 %v57, %v61
    %v63 = vmul.f32 %v60, %v61
    %v64 = vsub.f32 %v52, %v62
    %v65 = vsub.f32 %v53, %v63
    %v66 = vmul.f32 %v64, %v64
    %v67 = vmul.f32 %v65, %v65
    %v68 = vsel %vm54, %v66, 0.0
    %69 = vadd.xlane.f32.xlu0 %v68
    %v70 = vpop.xlane.xlu0 %69
    %v71 = vsel %vm54, %v67, 0.0
    %72 = vadd.xlane.f32.xlu0 %v71
    %v73 = vpop.xlane.xlu0 %72
    %v74 = vmul.f32 %v70, 0.032258064
    %v75 = vmul.f32 %v73, 0.032258064
    %v76 = vrsqrt.pop %v74
    %v77 = vmul.f32 %v74, %v76
    %vm78 = vcmp.eq.f32.partialorder %v74, inf
    %v79 = vsel %vm78, %v74, %v77
    %vm80 = vcmp.eq.f32.partialorder %v74, 0.0
    %v81 = vand.u32 %v74, 2147483648
    %v82 = vsel %vm80, %v81, %v79
    %v83 = vrsqrt.pop %v75
    %v84 = vmul.f32 %v75, %v83
    %vm85 = vcmp.eq.f32.partialorder %v75, inf
    %v86 = vsel %vm85, %v75, %v84
    %vm87 = vcmp.eq.f32.partialorder %v75, 0.0
    %v88 = vand.u32 %v75, 2147483648
    %v89 = vsel %vm87, %v88, %v86
    %v90 = vadd.f32 %v82, 1e-06
    %v91 = vadd.f32 %v89, 1e-06
    %v92 = vrcp.pop %v90
    %v93 = vmul.f32 1.0, %v92
    %v94 = vrcp.pop %v91
    %v95 = vmul.f32 1.0, %v94
    %v96 = vld [vmem:[#allocation5] sm:$0x1]
    %v97 = vmul.f32 %v64, %v93
    %v98 = vmul.f32 %v65, %v95
    %v100 = vlaneseq
    %v101 = vshrl.u32 %v100, 7
    %v102 = vsub.s32 0, %v101
    %v103 = vrot.slane %v96, %v102
    %v105 = vmul.f32 %v103, %v97
    %v106 = vmul.f32 %v103, %v98
    %v107 = vld [vmem:[#allocation7] sm:$0x1]
    %v109 = vlaneseq
    %v110 = vshrl.u32 %v109, 7
    %v111 = vsub.s32 0, %v110
    %v112 = vrot.slane %v107, %v111
    %v114 = vadd.f32 %v105, %v112
    %v115 = vadd.f32 %v106, %v112
    %116 = vst.msk [vmem:[#allocation8] sm:$0xff] %vm54, %v114
    %117 = vst.msk [vmem:[#allocation8 + $0x8] sm:$0xff] %vm54, %v115
    // Predicated region
    $region26: #{tpu_custom_call.1} parent=1 // pred_check
      _
    $region27: #{tpu_custom_call.1} parent=1 // pred_check_branch
      %119 = sbr.rel (0) target = $region29
    $region28: #{tpu_custom_call.1} parent=1 // pred_region
      %s121 = ssub.s32 256, 256
      %122 = vsyncadd [#allocation4], %s121
      %s123 = sshll.u32 [#allocation8], 4
      %s124 = int_to_ptr.vmem [resolvable:$true] %s123
      %129 = dma.vmem_to_hbm [thread:$0]  %s124, 256, %s3, [#allocation4], 128, 128, 8
    $region29: #{tpu_custom_call.1} parent=1 // pred_fallthru
      _
    // Predicated region
    $region30: #{tpu_custom_call.1} parent=1 // pred_check
      _
    $region31: #{tpu_custom_call.1} parent=1 // pred_check_branch
      %131 = sbr.rel (0) target = $region33
    $region32: #{tpu_custom_call.1} parent=1 // pred_region
      %132 = dma.done [#allocation4], 256
    $region33: #{tpu_custom_call.1} parent=1 // pred_fallthru
      _
    %133 = vsyncpa [#allocation3], 1
    %134 = vsyncpa [#allocation6], 1
    %135 = vsyncpa [#allocation4], 1

</llo_original>
